<compile_context>
chip_gen: v7x
topology: tpu7x:2x2x1
jax: 0.10.0
libtpu: 0.0.40
codegen_flags: <defaults>
</compile_context>

<pallas_src>
import functools

import jax
import jax.numpy as jnp
from jax.experimental import pallas as pl
from jax.experimental.pallas import tpu as pltpu


def _round_up(x, m):
    return (x + m - 1) // m * m


def _channel_pool_kernel(x_ref, o_ref, mx_ref, sm_ref, *, inv_c, c_total, need_c_mask):
    # x_ref block : (BN, CT, T) — CT channels on sublanes, T lane-dense spatial cols.
    # o_ref block : (BN, 2, T)  — row 0 = max over C, row 1 = mean over C.
    # mx_ref/sm_ref: (BN, T) f32 running accumulators, resident across the C grid axis.
    k = pl.program_id(2)

    @pl.when(k == 0)
    def _init():
        mx_ref[...] = jnp.full_like(mx_ref, -jnp.inf)
        sm_ref[...] = jnp.zeros_like(sm_ref)

    x = x_ref[...].astype(jnp.float32)  # (BN, CT, T)
    if need_c_mask:
        # Last channel block is padded past C; padded rows must not feed the reduction.
        ch = k * x.shape[1] + jax.lax.broadcasted_iota(jnp.int32, x.shape, 1)
        valid = ch < c_total
        x_max = jnp.where(valid, x, -jnp.inf)
        x_sum = jnp.where(valid, x, 0.0)
    else:
        x_max = x
        x_sum = x

    mx_ref[...] = jnp.maximum(mx_ref[...], jnp.max(x_max, axis=1))
    sm_ref[...] = sm_ref[...] + jnp.sum(x_sum, axis=1)

    @pl.when(k == pl.num_programs(2) - 1)
    def _finalize():
        # One full-block store (avoids masked partial vst.msk writes).
        res = jnp.stack([mx_ref[...], sm_ref[...] * inv_c], axis=1)  # (BN, 2, T)
        o_ref[...] = res.astype(o_ref.dtype)


def _vmem_capacity_bytes():
    try:
        return int(pltpu.get_tpu_info().vmem_capacity_bytes)
    except Exception:
        return 64 * 1024 * 1024  # conservative fallback (v7x per-TensorCore VMEM)


def channel_pool(x, *, vmem_budget_bytes=None):
    """x: (N, C, H, W) -> (N, 2, H, W) with [max_over_C, mean_over_C]."""
    N, C, H, W = x.shape
    HW = H * W
    xf = x.reshape(N, C, HW)  # contiguous reshape, free

    itemsize = jnp.dtype(x.dtype).itemsize
    pack = max(8, 32 // itemsize)  # sublane packing: 8 f32, 16 bf16, 32 int8

    # Generation-aware VMEM budgeting (v7x: 64 MiB physical; v5e/v6e: 128 MiB).
    vmem_cap = _vmem_capacity_bytes()
    vmem_limit = min(vmem_cap // 2, 64 * 1024 * 1024)
    budget = int(vmem_limit * 0.75) if vmem_budget_bytes is None else int(vmem_budget_bytes)

    def step_bytes(bn, ct, t):
        inp = 2 * bn * _round_up(ct, pack) * t * itemsize   # double-buffered input
        out = 2 * bn * _round_up(2, pack) * t * itemsize    # double-buffered output
        scr = 2 * _round_up(bn, 8) * t * 4                  # f32 max+sum accumulators
        return inp + out + scr

    MAX_T, MIN_T = 2048, 1024

    # Spatial tile: lane-dense, multiple of 128 (or the full extent when HW < 128).
    T = HW if HW <= 128 else min(MAX_T, _round_up(HW, 128))
    CT = C
    BN = 1

    # Over budget? First shrink T (but not below ~1024 lanes), ...
    min_t = T if HW <= 128 else max(128, min(MIN_T, T))
    while step_bytes(BN, CT, T) > budget and T > min_t:
        T = max(min_t, _round_up((T + 1) // 2, 128))
    # ... then split the channel axis (keeps DMA rows wide for large C), ...
    while step_bytes(BN, CT, T) > budget and CT > pack:
        CT = max(pack, _round_up((CT + 1) // 2, pack))
    # ... then, as a last resort, shrink T further toward 128 lanes.
    while step_bytes(BN, CT, T) > budget and HW > 128 and T > 128:
        T = max(128, _round_up((T + 1) // 2, 128))

    # Fold multiple batch items per step when blocks are small (amortizes the
    # ~0.35 us/grid-step pipeline overhead for small images).
    fold_target = min(budget, 4 * 1024 * 1024)
    while BN < N and step_bytes(min(N, BN * 2), CT, T) <= fold_target:
        BN = min(N, BN * 2)

    # Keep >= 4 parallel grid steps when possible (v7x has 2 TensorCores).
    def _parallel_steps(bn, t):
        return pl.cdiv(N, bn) * pl.cdiv(HW, t)

    while _parallel_steps(BN, T) < 4:
        if BN > 1:
            BN = (BN + 1) // 2
        elif HW > 128 and T > 128:
            new_t = max(128, _round_up((T + 1) // 2, 128))
            if new_t == T:
                break
            T = new_t
        else:
            break

    KC = pl.cdiv(C, CT)
    need_c_mask = (C % CT) != 0
    grid = (pl.cdiv(N, BN), pl.cdiv(HW, T), KC)  # reduction (C) axis last

    kernel = functools.partial(
        _channel_pool_kernel, inv_c=1.0 / C, c_total=C, need_c_mask=need_c_mask
    )

    out = pl.pallas_call(
        kernel,
        out_shape=jax.ShapeDtypeStruct((N, 2, HW), x.dtype),
        grid=grid,
        # TODO(synk): if profiling shows exposed DMA with small blocks, try
        # pipeline_mode=pl.Buffered(3) on the input BlockSpec (re-check VMEM budget).
        in_specs=[pl.BlockSpec((BN, CT, T), lambda n, s, k: (n, k, s))],
        out_specs=pl.BlockSpec((BN, 2, T), lambda n, s, k: (n, 0, s)),
        scratch_shapes=[
            pltpu.VMEM((BN, T), jnp.float32),  # running max
            pltpu.VMEM((BN, T), jnp.float32),  # running sum
        ],
        compiler_params=pltpu.CompilerParams(
            dimension_semantics=("parallel", "parallel", "arbitrary"),
            vmem_limit_bytes=vmem_limit,
        ),
        cost_estimate=pl.CostEstimate(
            flops=2 * N * C * HW,
            transcendentals=0,
            bytes_accessed=N * C * HW * itemsize + N * 2 * HW * itemsize,
        ),
    )(xf)
    return out.reshape(N, 2, H, W)


def _reference(x):
    return jnp.concatenate(
        [jnp.max(x, axis=1, keepdims=True), jnp.mean(x, axis=1, keepdims=True)], axis=1
    )


if __name__ == "__main__":
    key = jax.random.PRNGKey(0)

    # Main small shape consistent with the module (N=2, C=4, 16x16).
    x = jax.random.normal(key, (2, 4, 16, 16), dtype=jnp.float32)
    out = jax.block_until_ready(channel_pool(x))
    assert out.shape == (2, 2, 16, 16), out.shape
    assert jnp.allclose(out, _reference(x), atol=1e-5, rtol=1e-5), "mismatch (main)"

    # Non-divisible spatial extent (HW = 130) -> locks in masked output writeback.
    k1, k2 = jax.random.split(key)
    x2 = jax.random.normal(k1, (2, 6, 10, 13), dtype=jnp.float32)
    out2 = jax.block_until_ready(channel_pool(x2))
    assert jnp.allclose(out2, _reference(x2), atol=1e-5, rtol=1e-5), "mismatch (ragged HW)"

    # Tiny budget forces the channel-axis accumulator path (C split + channel mask).
    x3 = jax.random.normal(k2, (2, 24, 16, 16), dtype=jnp.float32)
    out3 = jax.block_until_ready(channel_pool(x3, vmem_budget_bytes=64 * 1024))
    assert jnp.allclose(out3, _reference(x3), atol=1e-5, rtol=1e-5), "mismatch (C-split)"

    print("KERNEL_OK")
</pallas_src>

<mosaic_0001>
module attributes {stable_mosaic.version = 11 : i64} {
  func.func @_channel_pool_kernel(%arg0: i32, %arg1: i32, %arg2: i32, %arg3: memref<1x4x128xf32, #tpu.memory_space<vmem>>, %arg4: memref<1x2x128xf32, #tpu.memory_space<vmem>>, %arg5: memref<1x128xf32, #tpu.memory_space<vmem>>, %arg6: memref<1x128xf32, #tpu.memory_space<vmem>>) attributes {dimension_semantics = [#tpu.dimension_semantics<parallel>, #tpu.dimension_semantics<parallel>, #tpu.dimension_semantics<arbitrary>], iteration_bounds = array<i64: 2, 2, 1>, scalar_prefetch = 0 : i64, scratch_operands = 2 : i64, tpu.core_type = #tpu.core_type<tc>, window_params = [{transform_indices = @transform_0, window_bounds = array<i64: 1, 4, 128>}, {transform_indices = @transform_1, window_bounds = array<i64: 1, 2, 128>}]} {
    %c0_i32 = arith.constant 0 : i32
    %0 = arith.cmpi eq, %arg2, %c0_i32 : i32
    %1 = arith.extui %0 : i1 to i32
    %c0_i32_0 = arith.constant 0 : i32
    %2 = arith.cmpi ne, %1, %c0_i32_0 : i32
    scf.if %2 {
      %cst_14 = arith.constant 0xFF800000 : f32
      %15 = vector.broadcast %cst_14 : f32 to vector<1x128xf32>
      %c0_15 = arith.constant 0 : index
      %c0_16 = arith.constant 0 : index
      %16 = vector.load %arg5[%c0_15, %c0_16] : memref<1x128xf32, #tpu.memory_space<vmem>>, vector<1x128xf32>
      tpu.vector_store %arg5[%c0_15, %c0_16], %15 {strides = array<i32>} : memref<1x128xf32, #tpu.memory_space<vmem>>, vector<1x128xf32>,
      %cst_17 = arith.constant 0.000000e+00 : f32
      %17 = vector.broadcast %cst_17 : f32 to vector<1x128xf32>
      %c0_18 = arith.constant 0 : index
      %c0_19 = arith.constant 0 : index
      %18 = vector.load %arg6[%c0_18, %c0_19] : memref<1x128xf32, #tpu.memory_space<vmem>>, vector<1x128xf32>
      tpu.vector_store %arg6[%c0_18, %c0_19], %17 {strides = array<i32>} : memref<1x128xf32, #tpu.memory_space<vmem>>, vector<1x128xf32>,
    } else {
    }
    %c0 = arith.constant 0 : index
    %c0_1 = arith.constant 0 : index
    %c0_2 = arith.constant 0 : index
    %3 = vector.load %arg3[%c0, %c0_1, %c0_2] : memref<1x4x128xf32, #tpu.memory_space<vmem>>, vector<1x4x128xf32>
    %c0_3 = arith.constant 0 : index
    %c0_4 = arith.constant 0 : index
    %4 = vector.load %arg5[%c0_3, %c0_4] : memref<1x128xf32, #tpu.memory_space<vmem>>, vector<1x128xf32>
    %cst = arith.constant dense<0xFF800000> : vector<1x128xf32>
    %5 = vector.multi_reduction <maximumf>, %3, %cst [1] : vector<1x4x128xf32> to vector<1x128xf32>
    %6 = arith.maximumf %4, %5 : vector<1x128xf32>
    %c0_5 = arith.constant 0 : index
    %c0_6 = arith.constant 0 : index
    %7 = vector.load %arg5[%c0_5, %c0_6] : memref<1x128xf32, #tpu.memory_space<vmem>>, vector<1x128xf32>
    tpu.vector_store %arg5[%c0_5, %c0_6], %6 {strides = array<i32>} : memref<1x128xf32, #tpu.memory_space<vmem>>, vector<1x128xf32>,
    %c0_7 = arith.constant 0 : index
    %c0_8 = arith.constant 0 : index
    %8 = vector.load %arg6[%c0_7, %c0_8] : memref<1x128xf32, #tpu.memory_space<vmem>>, vector<1x128xf32>
    %cst_9 = arith.constant dense<0.000000e+00> : vector<1x128xf32>
    %9 = vector.multi_reduction <add>, %3, %cst_9 [1] : vector<1x4x128xf32> to vector<1x128xf32>
    %10 = arith.addf %8, %9 : vector<1x128xf32>
    %c0_10 = arith.constant 0 : index
    %c0_11 = arith.constant 0 : index
    %11 = vector.load %arg6[%c0_10, %c0_11] : memref<1x128xf32, #tpu.memory_space<vmem>>, vector<1x128xf32>
    tpu.vector_store %arg6[%c0_10, %c0_11], %10 {strides = array<i32>} : memref<1x128xf32, #tpu.memory_space<vmem>>, vector<1x128xf32>,
    %c0_i32_12 = arith.constant 0 : i32
    %12 = arith.cmpi eq, %arg2, %c0_i32_12 : i32
    %13 = arith.extui %12 : i1 to i32
    %c0_i32_13 = arith.constant 0 : i32
    %14 = arith.cmpi ne, %13, %c0_i32_13 : i32
    scf.if %14 {
      %c0_14 = arith.constant 0 : index
      %c0_15 = arith.constant 0 : index
      %15 = vector.load %arg5[%c0_14, %c0_15] : memref<1x128xf32, #tpu.memory_space<vmem>>, vector<1x128xf32>
      %c0_16 = arith.constant 0 : index
      %c0_17 = arith.constant 0 : index
      %16 = vector.load %arg6[%c0_16, %c0_17] : memref<1x128xf32, #tpu.memory_space<vmem>>, vector<1x128xf32>
      %cst_18 = arith.constant 2.500000e-01 : f32
      %17 = vector.broadcast %cst_18 : f32 to vector<1x128xf32>
      %18 = arith.mulf %16, %17 : vector<1x128xf32>
      %19 = vector.shape_cast %15 : vector<1x128xf32> to vector<1x1x128xf32>
      %20 = vector.shape_cast %18 : vector<1x128xf32> to vector<1x1x128xf32>
      %21 = tpu.concatenate %19, %20 in 1 : vector<1x1x128xf32>, vector<1x1x128xf32> -> vector<1x2x128xf32>
      %c0_19 = arith.constant 0 : index
      %c0_20 = arith.constant 0 : index
      %c0_21 = arith.constant 0 : index
      %22 = vector.load %arg4[%c0_19, %c0_20, %c0_21] : memref<1x2x128xf32, #tpu.memory_space<vmem>>, vector<1x2x128xf32>
      tpu.vector_store %arg4[%c0_19, %c0_20, %c0_21], %21 {strides = array<i32>} : memref<1x2x128xf32, #tpu.memory_space<vmem>>, vector<1x2x128xf32>,
    } else {
    }
    return
  }
  func.func @transform_0(%arg0: i32, %arg1: i32, %arg2: i32) -> (i32, i32, i32) {
    %c0_i32 = arith.constant 0 : i32
    return %arg0, %arg2, %arg1 : i32, i32, i32
  }
  func.func @transform_1(%arg0: i32, %arg1: i32, %arg2: i32) -> (i32, i32, i32) {
    %c0_i32 = arith.constant 0 : i32
    %c0_i32_0 = arith.constant 0 : i32
    return %arg0, %c0_i32, %arg1 : i32, i32, i32
  }
}

</mosaic_0001>

<llo_original>
// kernel: tpu_custom_call.1
$region0: #{tpu_custom_call.1}
  #allocation0 [shape = 'u32[]', space=smem, size = 0x4, offset = 0x4, fixed_abs, tag = 'smem constant byte address 0x4 - core index']
  #allocation1 [shape = 'u32[144,128]{1,0:T(1,128)}', space=vmem, size = 0x12000, scoped, tag = 'internal scratch']
  #allocation2 [shape = 'f32[1,128]{1,0:T(1,128)}', space=vmem, size = 0x200, scoped, tag = 'scratch operand']
  #allocation3 [shape = 'f32[1,128]{1,0:T(1,128)}', space=vmem, size = 0x200, scoped, tag = 'scratch operand']
  %s0 = inlined_call_operand.hbm [shape: f32[2,4,256], index: 0, kind: input, shape index: {}]
  %s1 = inlined_call_operand.hbm [shape: f32[2,2,256], index: 1, kind: output, shape index: {}]
  %s2 = sld [smem:[#allocation0]]
  $region49: #{tpu_custom_call.1} parent=0
    _
  %s4 = ssub.s32 1, %s2
  %s5 = scalar_select 0, %s4, %s2
  $region1: #{tpu_custom_call.1} parent=0
    #allocation4 [shape = 'u8[4096]{0}', space=vmem, size = 0x1000, scoped, tag = 'input window, operand 0']
    #allocation5 [shape = 's32[2]{0}', space=sflag, size = 0x8, scoped, tag = 'scoped memory for tpu_custom_call.1']
    #allocation6 [shape = 's32[2]{0}', space=sflag, size = 0x8, scoped, tag = 'scoped memory for tpu_custom_call.1']
    #allocation7 [shape = 'u8[2048]{0}', space=vmem, size = 0x800, scoped, tag = 'output window, operand 0']
    %6 = vsyncpa [#allocation5], 0
    %s7 = scalar_lea.sflag [#allocation5], 1
    %8 = vsyncpa %s7, 0
    %9 = vsyncpa [#allocation6], 0
    %s10 = scalar_lea.sflag [#allocation6], 1
    %11 = vsyncpa %s10, 0
    loop: start=0, step=1, limit=6
    $region2: #{tpu_custom_call.1} parent=1 // loop_pre_header
      _
    $region3: #{tpu_custom_call.1} parent=1 // loop_header
      %s13 = sphi 0, %s17
      %p14 = scmp.ge.s32.totalorder %s13, 6
      %s20 = sphi 0, %s39
      %s21 = sphi 0, %s35
      %s22 = sphi 0, %s31
      %s23 = sphi 0, %s20
      %s24 = sphi 0, %s21
      %s25 = sphi 0, %s22
      %s26 = sphi 0, %s23
      %s27 = sphi 0, %s24
      %s28 = sphi 0, %s25
      %s46 = sphi 0, %s48
      %s49 = sphi 0, %s46
      %s50 = sphi 0, %s49
      %s66 = sphi 0, %s50
      %s74 = sphi 0, %s76
      %s77 = sphi 0, %s74
      %s78 = sphi 0, %s77
      %s94 = sphi 0, %s78
    $region4: #{tpu_custom_call.1} parent=1 // loop_header_branch
      %16 = sbr.rel (%p14) target = $region8
    $region5: #{tpu_custom_call.1} parent=1 // loop_body
      %s18 = ssub.s32 %s13, 1
      %s19 = ssub.s32 %s13, 2
      %s29 = sadd.s32 1, %s22
      %p30 = scmp.ge.s32.totalorder %s29, 1
      %s31 = scalar_select %p30, 0, %s29
      %s32 = sadd.s32 1, %s21
      %s33 = scalar_select %p30, %s32, %s21
      %p34 = scmp.ge.s32.totalorder %s33, 2
      %s35 = scalar_select %p34, 0, %s33
      %s36 = sadd.s32 1, %s20
      %s37 = scalar_select %p34, %s36, %s20
      %p38 = scmp.ge.s32.totalorder %s37, 2
      %s39 = scalar_select %p38, 0, %s37
      %s40 = ssub.s32 %s20, %s39
      %s41 = ssub.s32 %s22, %s31
      %s42 = sor.u32 %s40, %s41
      %s43 = ssub.s32 %s21, %s35
      %s44 = sor.u32 %s42, %s43
      %p45 = scmp.eq.s32.totalorder %s44, 0
      %s47 = sadd.s32 %s46, 1
      %s48 = scalar_select %p45, %s46, %s47
      %p51 = pneg %p45
      %p52 = scmp.eq.s32.totalorder %s13, 3
      %p53 = por %p51, %p52
      %p54 = scmp.ne.s32.totalorder %s46, %s49
      %p55 = scmp.eq.s32.totalorder %s13, 0
      %p56 = por %p54, %p55
      %p57 = scmp.ne.s32.totalorder %s46, %s49
      %p58 = scmp.eq.s32.totalorder %s18, 3
      %p59 = por %p57, %p58
      %p60 = scmp.ne.s32.totalorder %s49, %s50
      %p61 = scmp.eq.s32.totalorder %s18, 0
      %p62 = por %p60, %p61
      %p63 = scmp.ne.s32.totalorder %s49, %s50
      %p64 = scmp.eq.s32.totalorder %s19, 3
      %p65 = por %p63, %p64
      %p67 = scmp.ne.s32.totalorder %s50, %s66
      %p68 = scmp.eq.s32.totalorder %s19, 0
      %p69 = por %p67, %p68
      %s70 = ssub.s32 %s20, %s39
      %s71 = ssub.s32 %s21, %s35
      %s72 = sor.u32 %s70, %s71
      %p73 = scmp.eq.s32.totalorder %s72, 0
      %s75 = sadd.s32 %s74, 1
      %s76 = scalar_select %p73, %s74, %s75
      %p79 = pneg %p73
      %p80 = scmp.eq.s32.totalorder %s13, 3
      %p81 = por %p79, %p80
      %p82 = scmp.ne.s32.totalorder %s74, %s77
      %p83 = scmp.eq.s32.totalorder %s13, 0
      %p84 = por %p82, %p83
      %p85 = scmp.ne.s32.totalorder %s74, %s77
      %p86 = scmp.eq.s32.totalorder %s18, 3
      %p87 = por %p85, %p86
      %p88 = scmp.ne.s32.totalorder %s77, %s78
      %p89 = scmp.eq.s32.totalorder %s18, 0
      %p90 = por %p88, %p89
      %p91 = scmp.ne.s32.totalorder %s77, %s78
      %p92 = scmp.eq.s32.totalorder %s19, 3
      %p93 = por %p91, %p92
      %p95 = scmp.ne.s32.totalorder %s78, %s94
      %p96 = scmp.eq.s32.totalorder %s19, 0
      %p97 = por %p95, %p96
      %p98 = scmp.le.s32.totalorder 1, %s13
      %p99 = scmp.lt.s32.totalorder %s13, 5
      %p100 = pnand %p98, %p99
      %p101 = pneg %p100
      // Predicated region
      $region9: #{tpu_custom_call.1} parent=5 // pred_check
        _
      $region10: #{tpu_custom_call.1} parent=5 // pred_check_branch
        %103 = sbr.rel (%p100) target = $region12
      $region11: #{tpu_custom_call.1} parent=5 // pred_region
        %s104 = ssub.s32 %s13, 1
      $region12: #{tpu_custom_call.1} parent=5 // pred_fallthru
        _
      %p105 = scmp.lt.s32.totalorder %s13, 4
      // Predicated region
      $region13: #{tpu_custom_call.1} parent=5 // pred_check
        %p106 = pneg %p105
      $region14: #{tpu_custom_call.1} parent=5 // pred_check_branch
        %108 = sbr.rel (%p106) target = $region16
      $region15: #{tpu_custom_call.1} parent=5 // pred_region
        // Predicated region
        $region17: #{tpu_custom_call.1} parent=15 // pred_check
          %p109 = pneg %p56
        $region18: #{tpu_custom_call.1} parent=15 // pred_check_branch
          %111 = sbr.rel (%p109) target = $region20
        $region19: #{tpu_custom_call.1} parent=15 // pred_region
          %s112 = sand.u32 %s46, 1
          %s113 = scalar_lea.sflag [#allocation5], %s112
          %s114 = sand.u32 %s46, 1
          %s115 = smul.addr %s114, 4
          %s116 = scalar_lea.vmem [#allocation4], %s115
          %s118 = ssub.s32 64, 64
          %119 = vsyncadd %s113, %s118
          %s120 = smul.addr %s22, 2
          %s121 = sadd.s32 %s21, %s120
          %s122 = smul.addr %s20, 2
          %s123 = sadd.s32 %s121, %s122
          %s124 = smul.addr %s123, 64
          %s125 = scalar_lea.hbm %s0, %s124
          %s127 = sshll.u32 %s116, 4
          %s128 = int_to_ptr.vmem [resolvable:$true] %s127
          %130 = dma.hbm_to_vmem [thread:$0]  %s125, 64, %s128, %s113
        $region20: #{tpu_custom_call.1} parent=15 // pred_fallthru
          _
      $region16: #{tpu_custom_call.1} parent=5 // pred_fallthru
        _
      %p131 = scmp.le.s32.totalorder 1, %s13
      %p132 = scmp.lt.s32.totalorder %s13, 5
      %p133 = pnand %p131, %p132
      %p134 = pneg %p133
      // Predicated region
      $region21: #{tpu_custom_call.1} parent=5 // pred_check
        _
      $region22: #{tpu_custom_call.1} parent=5 // pred_check_branch
        %136 = sbr.rel (%p133) target = $region24
      $region23: #{tpu_custom_call.1} parent=5 // pred_region
        %s137 = ssub.s32 %s13, 1
        %s138 = sand.u32 %s49, 1
        %s139 = scalar_lea.sflag [#allocation5], %s138
        %s140 = sand.u32 %s49, 1
        %s141 = smul.addr %s140, 4
        %s142 = scalar_lea.vmem [#allocation4], %s141
        // Predicated region
        $region25: #{tpu_custom_call.1} parent=23 // pred_check
          %p143 = pneg %p62
        $region26: #{tpu_custom_call.1} parent=23 // pred_check_branch
          %145 = sbr.rel (%p143) target = $region28
        $region27: #{tpu_custom_call.1} parent=23 // pred_region
          %146 = dma.done %s139, 64
        $region28: #{tpu_custom_call.1} parent=23 // pred_fallthru
          _
        %s147 = sand.u32 %s49, 1
        %s148 = scalar_lea.sflag [#allocation5], %s147
        %s149 = sand.u32 %s49, 1
        %s150 = smul.addr %s149, 4
        %s151 = scalar_lea.vmem [#allocation4], %s150
        %p152 = pneg %p62
        %p153 = pneg %p59
        %p154 = pneg %p90
        %p155 = pneg %p87
        %s156 = sand.u32 %s77, 1
        %s157 = scalar_lea.sflag [#allocation6], %s156
        %s158 = sand.u32 %s77, 1
        %s159 = smul.addr %s158, 2
        %s160 = scalar_lea.vmem [#allocation7], %s159
        %p161 = scmp.eq.s32.totalorder %s25, 0
        // Predicated region
        $region29: #{tpu_custom_call.1} parent=23 // pred_check
          %p162 = pneg %p161
        $region30: #{tpu_custom_call.1} parent=23 // pred_check_branch
          %164 = sbr.rel (%p162) target = $region32
        $region31: #{tpu_custom_call.1} parent=23 // pred_region
          %165 = vst [vmem:[#allocation2] sm:$0x1] -inf
          %166 = vst [vmem:[#allocation3] sm:$0x1] 0.0
        $region32: #{tpu_custom_call.1} parent=23 // pred_fallthru
          _
        %v167 = vld [vmem:[%s142] sm:$0xf]
        %v168 = vld [vmem:[#allocation2] sm:$0x1]
        %vm169 = vcmask 1043456
        %v170 = vsel %vm169, %v167, -inf
        %v171 = vrot.slane %v170, 4
        %v172 = vmax.f32 %v170, %v171
        %v173 = vrot.slane %v172, 2
        %v174 = vmax.f32 %v172, %v173
        %v175 = vrot.slane %v174, 1
        %v176 = vmax.f32 %v174, %v175
        %v177 = vmax.f32 %v168, %v176
        %178 = vst [vmem:[#allocation2] sm:$0x1] %v177
        %v179 = vld [vmem:[#allocation3] sm:$0x1]
        %v180 = vsel %vm169, %v167, 0.0
        %v181 = vrot.slane %v180, 4
        %v182 = vadd.f32 %v180, %v181
        %v183 = vrot.slane %v182, 2
        %v184 = vadd.f32 %v182, %v183
        %v185 = vrot.slane %v184, 1
        %v186 = vadd.f32 %v184, %v185
        %v187 = vadd.f32 %v179, %v186
        %188 = vst [vmem:[#allocation3] sm:$0x1] %v187
        // Predicated region
        $region33: #{tpu_custom_call.1} parent=23 // pred_check
          %p189 = pneg %p161
        $region34: #{tpu_custom_call.1} parent=23 // pred_check_branch
          %191 = sbr.rel (%p189) target = $region36
        $region35: #{tpu_custom_call.1} parent=23 // pred_region
          %v192 = vld [vmem:[#allocation2] sm:$0x1]
          %v193 = vld [vmem:[#allocation3] sm:$0x1]
          %v194 = vmul.f32 %v193, 0.25
          %v196 = vlaneseq
          %v197 = vshrl.u32 %v196, 7
          %v198 = vsub.s32 0, %v197
          %v199 = vrot.slane %v194, %v198
          %vm201 = vcmask 1040384
          %v202 = vsel %vm201, %v192, %v199
          %203 = vst [vmem:[%s160] sm:$0x3] %v202
        $region36: #{tpu_custom_call.1} parent=23 // pred_fallthru
          _
        %s204 = sand.u32 %s77, 1
        %s205 = scalar_lea.sflag [#allocation6], %s204
        %s206 = sand.u32 %s77, 1
        %s207 = smul.addr %s206, 2
        %s208 = scalar_lea.vmem [#allocation7], %s207
        // Predicated region
        $region37: #{tpu_custom_call.1} parent=23 // pred_check
          %p209 = pneg %p87
        $region38: #{tpu_custom_call.1} parent=23 // pred_check_branch
          %211 = sbr.rel (%p209) target = $region40
        $region39: #{tpu_custom_call.1} parent=23 // pred_region
          %s213 = ssub.s32 32, 32
          %214 = vsyncadd %s205, %s213
          %s215 = smul.addr %s23, 2
          %s216 = sadd.s32 %s24, %s215
          %s217 = smul.addr %s216, 32
          %s218 = scalar_lea.hbm %s1, %s217
          %s220 = sshll.u32 %s208, 4
          %s221 = int_to_ptr.vmem [resolvable:$true] %s220
          %223 = dma.vmem_to_hbm [thread:$0]  %s221, 32, %s218, %s205
        $region40: #{tpu_custom_call.1} parent=23 // pred_fallthru
          _
      $region24: #{tpu_custom_call.1} parent=5 // pred_fallthru
        _
      %p224 = scmp.le.s32.totalorder 2, %s13
      // Predicated region
      $region41: #{tpu_custom_call.1} parent=5 // pred_check
        %p225 = pneg %p224
      $region42: #{tpu_custom_call.1} parent=5 // pred_check_branch
        %227 = sbr.rel (%p225) target = $region44
      $region43: #{tpu_custom_call.1} parent=5 // pred_region
        %s228 = ssub.s32 %s13, 2
        // Predicated region
        $region45: #{tpu_custom_call.1} parent=43 // pred_check
          %p229 = pneg %p93
        $region46: #{tpu_custom_call.1} parent=43 // pred_check_branch
          %231 = sbr.rel (%p229) target = $region48
        $region47: #{tpu_custom_call.1} parent=43 // pred_region
          %s232 = sand.u32 %s78, 1
          %s233 = scalar_lea.sflag [#allocation6], %s232
          %s234 = sand.u32 %s78, 1
          %s235 = smul.addr %s234, 2
          %s236 = scalar_lea.vmem [#allocation7], %s235
          %237 = dma.done %s233, 32
        $region48: #{tpu_custom_call.1} parent=43 // pred_fallthru
          _
      $region44: #{tpu_custom_call.1} parent=5 // pred_fallthru
        _
    $region6: #{tpu_custom_call.1} parent=1 // loop_footer
      %s17 = sadd.s32 1, %s13
    $region7: #{tpu_custom_call.1} parent=1 // loop_footer_branch
      %12 = sbr.rel target = $region3
    $region8: #{tpu_custom_call.1} parent=1 // loop_exit
      _
    %238 = vsyncpa [#allocation5], 1
    %s239 = scalar_lea.sflag [#allocation5], 1
    %240 = vsyncpa %s239, 1
    %241 = vsyncpa [#allocation6], 1
    %s242 = scalar_lea.sflag [#allocation6], 1
    %243 = vsyncpa %s242, 1

</llo_original>
